<compile_context>
chip_gen: v7x
topology: tpu7x:2x2x1
jax: 0.10.0
libtpu: 0.0.40
codegen_flags: <defaults>
</compile_context>

<pallas_src>
import functools
from typing import NamedTuple

import jax
import jax.numpy as jnp
from jax.experimental import pallas as pl
from jax.experimental.pallas import tpu as pltpu


# ---------------------------------------------------------------------------
# Kernel
# ---------------------------------------------------------------------------
def swiglu_kernel(x_ref, wgu_ref, bgu_ref, wd_ref, bd_ref, o_ref, acc_ref):
    """Grid = (token tiles i, intermediate tiles j).  Accumulate over j."""
    j = pl.program_id(1)

    @pl.when(j == 0)
    def _():
        acc_ref[...] = jnp.zeros_like(acc_ref)

    ti = wd_ref.shape[0]                       # intermediate tile width (static)

    # Fused gate|up projection: one MXU matmul of (tm,Hp) x (Hp, 2*ti).
    gu = jnp.dot(x_ref[...], wgu_ref[...],
                 preferred_element_type=jnp.float32) + bgu_ref[...]
    g = gu[:, :ti]                              # 128/256-aligned lane slices
    u = gu[:, ti:]
    h = (g * jax.nn.sigmoid(g)) * u             # f32 SiLU * up, (tm, ti)

    acc_ref[...] += jnp.dot(h.astype(wd_ref.dtype), wd_ref[...],
                            preferred_element_type=jnp.float32)

    @pl.when(j == pl.num_programs(1) - 1)
    def _():
        o_ref[...] = (acc_ref[...] + bd_ref[...]).astype(o_ref.dtype)


# ---------------------------------------------------------------------------
# Prepared parameters + static config
# ---------------------------------------------------------------------------
class SwigluParams(NamedTuple):
    wgu: jax.Array      # (Hp, 2*Ip) gate|up weights interleaved per ti block
    bgu: jax.Array      # (1, 2*Ip)  gate|up biases (f32), same interleave
    wd: jax.Array       # (Ip, Hp)   down-proj weight
    bd: jax.Array       # (1, Hp)    down-proj bias (f32)


class SwigluConfig(NamedTuple):
    hidden: int
    inter: int
    Hp: int
    Ip: int
    ti: int
    tm_max: int
    vmem_limit: int


def _round_up(n, m):
    return ((n + m - 1) // m) * m


def _vmem_capacity_bytes():
    try:
        cap = getattr(pltpu.get_tpu_info(), "vmem_capacity_bytes", None)
        if cap:
            return int(cap)
    except Exception:
        pass
    return 64 << 20     # conservative (v7x per-core VMEM)


def _vmem_footprint(tm, ti, Hp, dsz, out_dsz):
    # Double-buffered streamed blocks.
    stream = (tm * Hp * dsz            # x tile
              + Hp * (2 * ti) * dsz    # fused gate|up weight tile
              + (2 * ti) * 4           # fused gate|up bias (f32)
              + ti * Hp * dsz          # down weight tile
              + Hp * 4                 # down bias (f32)
              + tm * Hp * out_dsz)     # output tile
    resident = tm * Hp * 4             # f32 accumulator scratch
    temps = (tm * 2 * ti + tm * ti) * 4  # gu / h in-kernel f32 temporaries
    return 2 * stream + resident + temps


def prepare_swiglu_params(w_gate, b_gate, w_up, b_up, w_down, b_down, *,
                          compute_dtype=jnp.bfloat16, tm=512, ti=1024):
    """Pad, cast and fuse the weights ONCE; reuse the result across calls."""
    H, I = w_gate.shape
    cdt = jnp.dtype(compute_dtype)
    dsz = cdt.itemsize

    # 256-alignment: full MXU tile occupancy on v6e/v7x (2x256^2 units).
    Hp = _round_up(H, 256)
    Ip0 = _round_up(I, 256)

    # VMEM-budget-driven tile selection (generation aware, no hard 64 MiB clamp).
    capacity = _vmem_capacity_bytes()
    budget = (capacity * 7) // 8        # ~112 MiB on v5e/v6e, ~56 MiB on v7x
    tm_eff = _round_up(max(tm, 8), 8)
    ti_eff = min(_round_up(max(ti, 128), 128), Ip0)
    while _vmem_footprint(tm_eff, ti_eff, Hp, dsz, 4) > budget:
        if ti_eff > 256:
            ti_eff //= 2                # shrink intermediate tile first
        elif tm_eff > 128:
            tm_eff = max(128, tm_eff // 2)
        else:
            break

    Ip = _round_up(Ip0, ti_eff)
    nj = Ip // ti_eff

    # Zero padding is exact: padded intermediate columns produce g = u = 0 ->
    # h = 0 and contribute nothing to the down projection; padded output
    # columns / token rows are sliced away by the wrapper.
    wg = jnp.pad(jnp.asarray(w_gate, cdt), ((0, Hp - H), (0, Ip - I)))
    wu = jnp.pad(jnp.asarray(w_up, cdt), ((0, Hp - H), (0, Ip - I)))
    wd = jnp.pad(jnp.asarray(w_down, cdt), ((0, Ip - I), (0, Hp - H)))
    bg = jnp.pad(jnp.asarray(b_gate, jnp.float32).reshape(1, I),
                 ((0, 0), (0, Ip - I)))
    bu = jnp.pad(jnp.asarray(b_up, jnp.float32).reshape(1, I),
                 ((0, 0), (0, Ip - I)))
    bd = jnp.pad(jnp.asarray(b_down, jnp.float32).reshape(1, H),
                 ((0, 0), (0, Hp - H)))

    # Fuse gate|up per ti block: block j holds [gate_j | up_j] of width 2*ti.
    wgu = jnp.concatenate(
        [wg.reshape(Hp, nj, ti_eff), wu.reshape(Hp, nj, ti_eff)],
        axis=-1).reshape(Hp, 2 * Ip)
    bgu = jnp.concatenate(
        [bg.reshape(1, nj, ti_eff), bu.reshape(1, nj, ti_eff)],
        axis=-1).reshape(1, 2 * Ip)

    fp = _vmem_footprint(tm_eff, ti_eff, Hp, dsz, 4)
    vmem_limit = int(max(32 << 20, min(fp + (8 << 20), budget)))

    params = SwigluParams(wgu=wgu, bgu=bgu, wd=wd, bd=bd)
    cfg = SwigluConfig(hidden=H, inter=I, Hp=Hp, Ip=Ip, ti=ti_eff,
                       tm_max=tm_eff, vmem_limit=vmem_limit)
    return params, cfg


# ---------------------------------------------------------------------------
# Wrapper
# ---------------------------------------------------------------------------
@functools.partial(jax.jit, static_argnames=("cfg",))
def swiglu_mlp(x, params: SwigluParams, cfg: SwigluConfig):
    """x: [..., H] -> [..., H].  Flattens leading dims into a token axis."""
    orig_shape = x.shape
    H, Hp, ti = cfg.hidden, cfg.Hp, cfg.ti
    x2 = x.reshape(-1, H)
    M = x2.shape[0]

    tm = min(cfg.tm_max, _round_up(M, 8))
    Mp = _round_up(M, tm)
    nj = cfg.Ip // ti

    # Cast activations to the compute dtype (bf16 by default) at the boundary.
    xp = jnp.pad(x2.astype(params.wgu.dtype), ((0, Mp - M), (0, Hp - H)))

    out = pl.pallas_call(
        swiglu_kernel,
        out_shape=jax.ShapeDtypeStruct((Mp, Hp), x.dtype),
        grid_spec=pltpu.PrefetchScalarGridSpec(
            num_scalar_prefetch=0,
            grid=(Mp // tm, nj),
            in_specs=[
                pl.BlockSpec((tm, Hp), lambda i, j: (i, 0)),        # x tile
                pl.BlockSpec((Hp, 2 * ti), lambda i, j: (0, j)),    # gate|up W
                pl.BlockSpec((1, 2 * ti), lambda i, j: (0, j)),     # gate|up b
                pl.BlockSpec((ti, Hp), lambda i, j: (j, 0)),        # down W
                pl.BlockSpec((1, Hp), lambda i, j: (0, 0)),         # down b
            ],
            out_specs=pl.BlockSpec((tm, Hp), lambda i, j: (i, 0)),
            scratch_shapes=[pltpu.VMEM((tm, Hp), jnp.float32)],
        ),
        compiler_params=pltpu.CompilerParams(
            dimension_semantics=("parallel", "arbitrary"),
            vmem_limit_bytes=cfg.vmem_limit,
        ),
    )(xp, params.wgu, params.bgu, params.wd, params.bd)

    return out[:M, :H].reshape(orig_shape)


# ---------------------------------------------------------------------------
# Reference + demo
# ---------------------------------------------------------------------------
def reference_mlp(x, w_gate, b_gate, w_up, b_up, w_down, b_down):
    g = x @ w_gate + b_gate
    u = x @ w_up + b_up
    h = jax.nn.silu(g) * u
    return h @ w_down + b_down


def _make_params(key, hidden_size, intermediate_size):
    kg, kbg, ku, kbu, kd, kbd = jax.random.split(key, 6)
    scale_h = 1.0 / jnp.sqrt(hidden_size)
    scale_i = 1.0 / jnp.sqrt(intermediate_size)
    w_gate = jax.random.uniform(kg, (hidden_size, intermediate_size),
                                minval=-scale_h, maxval=scale_h)
    b_gate = jax.random.uniform(kbg, (intermediate_size,),
                                minval=-scale_h, maxval=scale_h)
    w_up = jax.random.uniform(ku, (hidden_size, intermediate_size),
                              minval=-scale_h, maxval=scale_h)
    b_up = jax.random.uniform(kbu, (intermediate_size,),
                              minval=-scale_h, maxval=scale_h)
    w_down = jax.random.uniform(kd, (intermediate_size, hidden_size),
                                minval=-scale_i, maxval=scale_i)
    b_down = jax.random.uniform(kbd, (hidden_size,),
                                minval=-scale_i, maxval=scale_i)
    return w_gate, b_gate, w_up, b_up, w_down, b_down


if __name__ == "__main__":
    key = jax.random.PRNGKey(0)
    k_small, k_xs, k_big, k_xb = jax.random.split(key, 4)

    # --- Small config matching the module spec. ---
    hidden_size, intermediate_size = 32, 64
    batch, seq = 2, 8
    raw = _make_params(k_small, hidden_size, intermediate_size)
    x = jax.random.normal(k_xs, (batch, seq, hidden_size), dtype=jnp.float32)

    params, cfg = prepare_swiglu_params(*raw)        # prepared once, reused
    out = swiglu_mlp(x, params, cfg=cfg)
    out = jax.block_until_ready(out)
    ref = reference_mlp(x, *raw)
    assert out.shape == x.shape
    # bf16 compute path -> generous tolerance vs f32 reference.
    assert jnp.allclose(out, ref, atol=3e-2, rtol=3e-2), \
        "mismatch vs reference (small)"

    # --- Larger config exercising the multi-step (M, I) grid + accumulator. ---
    hidden_size, intermediate_size = 128, 384
    batch, seq = 4, 64
    raw = _make_params(k_big, hidden_size, intermediate_size)
    x = jax.random.normal(k_xb, (batch, seq, hidden_size), dtype=jnp.float32)

    params, cfg = prepare_swiglu_params(*raw, tm=128, ti=256)   # grid = (2, 2)
    out = swiglu_mlp(x, params, cfg=cfg)
    out = jax.block_until_ready(out)
    ref = reference_mlp(x, *raw)
    assert out.shape == x.shape
    assert jnp.allclose(out, ref, atol=5e-2, rtol=5e-2), \
        "mismatch vs reference (tiled)"

    print("KERNEL_OK")
</pallas_src>

<mosaic_0001>
module attributes {stable_mosaic.version = 11 : i64} {
  func.func @swiglu_kernel(%arg0: i32, %arg1: i32, %arg2: memref<16x256xbf16, #tpu.memory_space<vmem>>, %arg3: memref<256x512xbf16, #tpu.memory_space<vmem>>, %arg4: memref<1x512xf32, #tpu.memory_space<vmem>>, %arg5: memref<256x256xbf16, #tpu.memory_space<vmem>>, %arg6: memref<1x256xf32, #tpu.memory_space<vmem>>, %arg7: memref<16x256xf32, #tpu.memory_space<vmem>>, %arg8: memref<16x256xf32, #tpu.memory_space<vmem>>) attributes {dimension_semantics = [#tpu.dimension_semantics<parallel>, #tpu.dimension_semantics<arbitrary>], iteration_bounds = array<i64: 1, 1>, scalar_prefetch = 0 : i64, scratch_operands = 1 : i64, tpu.core_type = #tpu.core_type<tc>, window_params = [{transform_indices = @transform_0, window_bounds = array<i64: 16, 256>}, {transform_indices = @transform_1, window_bounds = array<i64: 256, 512>}, {transform_indices = @transform_2, window_bounds = array<i64: 1, 512>}, {transform_indices = @transform_3, window_bounds = array<i64: 256, 256>}, {pipeline_mode = #tpu.pipeline_mode<synchronous>, transform_indices = @transform_4, window_bounds = array<i64: 1, 256>}, {transform_indices = @transform_5, window_bounds = array<i64: 16, 256>}]} {
    %c0_i32 = arith.constant 0 : i32
    %0 = arith.cmpi eq, %arg1, %c0_i32 : i32
    %1 = arith.extui %0 : i1 to i32
    %c0_i32_0 = arith.constant 0 : i32
    %2 = arith.cmpi ne, %1, %c0_i32_0 : i32
    scf.if %2 {
      %cst_16 = arith.constant 0.000000e+00 : f32
      %27 = vector.broadcast %cst_16 : f32 to vector<16x256xf32>
      %c0_17 = arith.constant 0 : index
      %c0_18 = arith.constant 0 : index
      %28 = vector.load %arg8[%c0_17, %c0_18] : memref<16x256xf32, #tpu.memory_space<vmem>>, vector<16x256xf32>
      tpu.vector_store %arg8[%c0_17, %c0_18], %27 {strides = array<i32>} : memref<16x256xf32, #tpu.memory_space<vmem>>, vector<16x256xf32>,
    } else {
    }
    %c0 = arith.constant 0 : index
    %c0_1 = arith.constant 0 : index
    %3 = vector.load %arg2[%c0, %c0_1] : memref<16x256xbf16, #tpu.memory_space<vmem>>, vector<16x256xbf16>
    %c0_2 = arith.constant 0 : index
    %c0_3 = arith.constant 0 : index
    %4 = vector.load %arg3[%c0_2, %c0_3] : memref<256x512xbf16, #tpu.memory_space<vmem>>, vector<256x512xbf16>
    %cst = arith.constant dense<0.000000e+00> : vector<16x512xf32>
    %5 = tpu.matmul %3, %4, %cst {dimension_numbers = #tpu.dot_dimension_numbers<[1], [0], [0], [1], [0, 0, 1, 1], [], []>} : vector<16x256xbf16>, vector<256x512xbf16>, vector<16x512xf32> -> vector<16x512xf32>
    %c0_4 = arith.constant 0 : index
    %c0_5 = arith.constant 0 : index
    %6 = vector.load %arg4[%c0_4, %c0_5] : memref<1x512xf32, #tpu.memory_space<vmem>>, vector<1x512xf32>
    %7 = vector.broadcast %6 : vector<1x512xf32> to vector<16x512xf32>
    %8 = arith.addf %5, %7 : vector<16x512xf32>
    %9 = vector.extract_strided_slice %8 {offsets = [0, 0], sizes = [16, 256], strides = [1, 1]} : vector<16x512xf32> to vector<16x256xf32>
    %10 = vector.extract_strided_slice %8 {offsets = [0, 256], sizes = [16, 256], strides = [1, 1]} : vector<16x512xf32> to vector<16x256xf32>
    %11 = arith.negf %9 : vector<16x256xf32>
    %12 = math.exp %11 : vector<16x256xf32>
    %cst_6 = arith.constant 1.000000e+00 : f32
    %13 = vector.broadcast %cst_6 : f32 to vector<16x256xf32>
    %14 = arith.addf %13, %12 : vector<16x256xf32>
    %15 = arith.divf %13, %14 : vector<16x256xf32>
    %16 = arith.mulf %9, %15 : vector<16x256xf32>
    %17 = arith.mulf %16, %10 : vector<16x256xf32>
    %c0_7 = arith.constant 0 : index
    %c0_8 = arith.constant 0 : index
    %18 = vector.load %arg8[%c0_7, %c0_8] : memref<16x256xf32, #tpu.memory_space<vmem>>, vector<16x256xf32>
    %19 = arith.truncf %17 : vector<16x256xf32> to vector<16x256xbf16>
    %c0_9 = arith.constant 0 : index
    %c0_10 = arith.constant 0 : index
    %20 = vector.load %arg5[%c0_9, %c0_10] : memref<256x256xbf16, #tpu.memory_space<vmem>>, vector<256x256xbf16>
    %cst_11 = arith.constant dense<0.000000e+00> : vector<16x256xf32>
    %21 = tpu.matmul %19, %20, %cst_11 {dimension_numbers = #tpu.dot_dimension_numbers<[1], [0], [0], [1], [0, 0, 1, 1], [], []>} : vector<16x256xbf16>, vector<256x256xbf16>, vector<16x256xf32> -> vector<16x256xf32>
    %22 = arith.addf %18, %21 : vector<16x256xf32>
    %c0_12 = arith.constant 0 : index
    %c0_13 = arith.constant 0 : index
    %23 = vector.load %arg8[%c0_12, %c0_13] : memref<16x256xf32, #tpu.memory_space<vmem>>, vector<16x256xf32>
    tpu.vector_store %arg8[%c0_12, %c0_13], %22 {strides = array<i32>} : memref<16x256xf32, #tpu.memory_space<vmem>>, vector<16x256xf32>,
    %c0_i32_14 = arith.constant 0 : i32
    %24 = arith.cmpi eq, %arg1, %c0_i32_14 : i32
    %25 = arith.extui %24 : i1 to i32
    %c0_i32_15 = arith.constant 0 : i32
    %26 = arith.cmpi ne, %25, %c0_i32_15 : i32
    scf.if %26 {
      %c0_16 = arith.constant 0 : index
      %c0_17 = arith.constant 0 : index
      %27 = vector.load %arg8[%c0_16, %c0_17] : memref<16x256xf32, #tpu.memory_space<vmem>>, vector<16x256xf32>
      %c0_18 = arith.constant 0 : index
      %c0_19 = arith.constant 0 : index
      %28 = vector.load %arg6[%c0_18, %c0_19] : memref<1x256xf32, #tpu.memory_space<vmem>>, vector<1x256xf32>
      %29 = vector.broadcast %28 : vector<1x256xf32> to vector<16x256xf32>
      %30 = arith.addf %27, %29 : vector<16x256xf32>
      %c0_20 = arith.constant 0 : index
      %c0_21 = arith.constant 0 : index
      %31 = vector.load %arg7[%c0_20, %c0_21] : memref<16x256xf32, #tpu.memory_space<vmem>>, vector<16x256xf32>
      tpu.vector_store %arg7[%c0_20, %c0_21], %30 {strides = array<i32>} : memref<16x256xf32, #tpu.memory_space<vmem>>, vector<16x256xf32>,
    } else {
    }
    return
  }
  func.func @transform_0(%arg0: i32, %arg1: i32) -> (i32, i32) {
    %c0_i32 = arith.constant 0 : i32
    %c0_i32_0 = arith.constant 0 : i32
    return %arg0, %c0_i32 : i32, i32
  }
  func.func @transform_1(%arg0: i32, %arg1: i32) -> (i32, i32) {
    %c0_i32 = arith.constant 0 : i32
    %c0_i32_0 = arith.constant 0 : i32
    return %c0_i32, %arg1 : i32, i32
  }
  func.func @transform_2(%arg0: i32, %arg1: i32) -> (i32, i32) {
    %c0_i32 = arith.constant 0 : i32
    %c0_i32_0 = arith.constant 0 : i32
    return %c0_i32, %arg1 : i32, i32
  }
  func.func @transform_3(%arg0: i32, %arg1: i32) -> (i32, i32) {
    %c0_i32 = arith.constant 0 : i32
    %c0_i32_0 = arith.constant 0 : i32
    return %arg1, %c0_i32 : i32, i32
  }
  func.func @transform_4(%arg0: i32, %arg1: i32) -> (i32, i32) {
    %c0_i32 = arith.constant 0 : i32
    %c0_i32_0 = arith.constant 0 : i32
    %c0_i32_1 = arith.constant 0 : i32
    return %c0_i32, %c0_i32_0 : i32, i32
  }
  func.func @transform_5(%arg0: i32, %arg1: i32) -> (i32, i32) {
    %c0_i32 = arith.constant 0 : i32
    %c0_i32_0 = arith.constant 0 : i32
    return %arg0, %c0_i32 : i32, i32
  }
}

</mosaic_0001>

<llo_original>
// kernel: swiglu_mlp.1
$region0: #{swiglu_mlp.1}
  #allocation0 [shape = 'u32[]', space=smem, size = 0x4, offset = 0x4, fixed_abs, tag = 'smem constant byte address 0x4 - core index']
  #allocation1 [shape = 'u32[144,128]{1,0:T(1,128)}', space=vmem, size = 0x12000, scoped, tag = 'internal scratch']
  #allocation2 [shape = 'f32[16,256]{1,0:T(8,128)}', space=vmem, size = 0x4000, scoped, tag = 'scratch operand']
  %s0 = inlined_call_operand.vmem [shape: bf16[16,256], index: 0, kind: input, shape index: {}]
  %s1 = inlined_call_operand.hbm [shape: bf16[256,512], index: 1, kind: input, shape index: {}]
  %s2 = inlined_call_operand.vmem [shape: f32[1,512], index: 2, kind: input, shape index: {}]
  %s3 = inlined_call_operand.hbm [shape: bf16[256,256], index: 3, kind: input, shape index: {}]
  %s4 = inlined_call_operand.vmem [shape: f32[1,256], index: 4, kind: input, shape index: {}]
  %s5 = inlined_call_operand.vmem [shape: f32[16,256], index: 5, kind: output, shape index: {}]
  %s6 = sld [smem:[#allocation0]]
  $region46: #{swiglu_mlp.1} parent=0
    _
  %s8 = ssub.s32 1, %s6
  %s9 = scalar_select 0, %s8, %s6
  $region1: #{swiglu_mlp.1} parent=0
    #allocation3 [shape = 'u8[262144]{0}', space=vmem, size = 0x40000, scoped, tag = 'input window, operand 1, single buffered']
    #allocation4 [shape = 's32[1]{0}', space=sflag, size = 0x4, scoped, tag = 'scoped memory for swiglu_mlp.1']
    #allocation5 [shape = 'u8[131072]{0}', space=vmem, size = 0x20000, scoped, tag = 'input window, operand 3, single buffered']
    #allocation6 [shape = 's32[1]{0}', space=sflag, size = 0x4, scoped, tag = 'scoped memory for swiglu_mlp.1']
    %10 = vsyncpa [#allocation4], 0
    %11 = vsyncpa [#allocation6], 0
    // Predicated region
    $region2: #{swiglu_mlp.1} parent=1 // pred_check
      _
    $region3: #{swiglu_mlp.1} parent=1 // pred_check_branch
      %13 = sbr.rel (0) target = $region5
    $region4: #{swiglu_mlp.1} parent=1 // pred_region
      _
    $region5: #{swiglu_mlp.1} parent=1 // pred_fallthru
      _
    // Predicated region
    $region6: #{swiglu_mlp.1} parent=1 // pred_check
      _
    $region7: #{swiglu_mlp.1} parent=1 // pred_check_branch
      %15 = sbr.rel (0) target = $region9
    $region8: #{swiglu_mlp.1} parent=1 // pred_region
      %s17 = ssub.s32 8192, 8192
      %18 = vsyncadd [#allocation4], %s17
      %s19 = sshll.u32 [#allocation3], 4
      %s20 = int_to_ptr.vmem [resolvable:$true] %s19
      %25 = dma.hbm_to_vmem [thread:$0]  %s1, 8192, %s20, [#allocation4], 256, 256, 16
    $region9: #{swiglu_mlp.1} parent=1 // pred_fallthru
      _
    // Predicated region
    $region10: #{swiglu_mlp.1} parent=1 // pred_check
      _
    $region11: #{swiglu_mlp.1} parent=1 // pred_check_branch
      %27 = sbr.rel (0) target = $region13
    $region12: #{swiglu_mlp.1} parent=1 // pred_region
      _
    $region13: #{swiglu_mlp.1} parent=1 // pred_fallthru
      _
    // Predicated region
    $region14: #{swiglu_mlp.1} parent=1 // pred_check
      _
    $region15: #{swiglu_mlp.1} parent=1 // pred_check_branch
      %29 = sbr.rel (0) target = $region17
    $region16: #{swiglu_mlp.1} parent=1 // pred_region
      %s31 = ssub.s32 4096, 4096
      %32 = vsyncadd [#allocation6], %s31
      %s33 = sshll.u32 [#allocation5], 4
      %s34 = int_to_ptr.vmem [resolvable:$true] %s33
      %39 = dma.hbm_to_vmem [thread:$0]  %s3, 4096, %s34, [#allocation6], 128, 128, 8
    $region17: #{swiglu_mlp.1} parent=1 // pred_fallthru
      _
    // Predicated region
    $region18: #{swiglu_mlp.1} parent=1 // pred_check
      _
    $region19: #{swiglu_mlp.1} parent=1 // pred_check_branch
      %41 = sbr.rel (0) target = $region21
    $region20: #{swiglu_mlp.1} parent=1 // pred_region
      _
    $region21: #{swiglu_mlp.1} parent=1 // pred_fallthru
      _
    // Predicated region
    $region22: #{swiglu_mlp.1} parent=1 // pred_check
      _
    $region23: #{swiglu_mlp.1} parent=1 // pred_check_branch
      %43 = sbr.rel (0) target = $region25
    $region24: #{swiglu_mlp.1} parent=1 // pred_region
      %44 = dma.done [#allocation4], 8192
    $region25: #{swiglu_mlp.1} parent=1 // pred_fallthru
      _
    // Predicated region
    $region26: #{swiglu_mlp.1} parent=1 // pred_check
      _
    $region27: #{swiglu_mlp.1} parent=1 // pred_check_branch
      %46 = sbr.rel (0) target = $region29
    $region28: #{swiglu_mlp.1} parent=1 // pred_region
      %47 = dma.done [#allocation6], 4096
    $region29: #{swiglu_mlp.1} parent=1 // pred_fallthru
      _
    %p48 = scmp.eq.s32.totalorder 0, 0
    // Predicated region
    $region30: #{swiglu_mlp.1} parent=1 // pred_check
      %p49 = pneg %p48
    $region31: #{swiglu_mlp.1} parent=1 // pred_check_branch
      %51 = sbr.rel (%p49) target = $region33
    $region32: #{swiglu_mlp.1} parent=1 // pred_region
      %52 = vst [vmem:[#allocation2] sm:$0xff] 0.0
      %53 = vst [vmem:[#allocation2 + $0x8] sm:$0xff] 0.0
      %54 = vst [vmem:[#allocation2 + $0x10] sm:$0xff] 0.0
      %55 = vst [vmem:[#allocation2 + $0x18] sm:$0xff] 0.0
    $region33: #{swiglu_mlp.1} parent=1 // pred_fallthru
      _
    %v56 = vld [vmem:[%s0] sm:$0xff]
    %v57 = vld [vmem:[%s0 + $0x8] sm:$0xff]
    %v58 = vld [vmem:[#allocation3] sm:$0xff]
    %v59 = vld [vmem:[#allocation3 + $0x8] sm:$0xff]
    %v60 = vld [vmem:[#allocation3 + $0x10] sm:$0xff]
    %v61 = vld [vmem:[#allocation3 + $0x18] sm:$0xff]
    %v62 = vld [vmem:[#allocation3 + $0x20] sm:$0xff]
    %v63 = vld [vmem:[#allocation3 + $0x28] sm:$0xff]
    %v64 = vld [vmem:[#allocation3 + $0x30] sm:$0xff]
    %v65 = vld [vmem:[#allocation3 + $0x38] sm:$0xff]
    %v66 = vld [vmem:[#allocation3 + $0x40] sm:$0xff]
    %v67 = vld [vmem:[#allocation3 + $0x48] sm:$0xff]
    %v68 = vld [vmem:[#allocation3 + $0x50] sm:$0xff]
    %v69 = vld [vmem:[#allocation3 + $0x58] sm:$0xff]
    %v70 = vld [vmem:[#allocation3 + $0x60] sm:$0xff]
    %v71 = vld [vmem:[#allocation3 + $0x68] sm:$0xff]
    %v72 = vld [vmem:[#allocation3 + $0x70] sm:$0xff]
    %v73 = vld [vmem:[#allocation3 + $0x78] sm:$0xff]
    %v74 = vld [vmem:[#allocation3 + $0x80] sm:$0xff]
    %v75 = vld [vmem:[#allocation3 + $0x88] sm:$0xff]
    %v76 = vld [vmem:[#allocation3 + $0x90] sm:$0xff]
    %v77 = vld [vmem:[#allocation3 + $0x98] sm:$0xff]
    %v78 = vld [vmem:[#allocation3 + $0xa0] sm:$0xff]
    %v79 = vld [vmem:[#allocation3 + $0xa8] sm:$0xff]
    %v80 = vld [vmem:[#allocation3 + $0xb0] sm:$0xff]
    %v81 = vld [vmem:[#allocation3 + $0xb8] sm:$0xff]
    %v82 = vld [vmem:[#allocation3 + $0xc0] sm:$0xff]
    %v83 = vld [vmem:[#allocation3 + $0xc8] sm:$0xff]
    %v84 = vld [vmem:[#allocation3 + $0xd0] sm:$0xff]
    %v85 = vld [vmem:[#allocation3 + $0xd8] sm:$0xff]
    %v86 = vld [vmem:[#allocation3 + $0xe0] sm:$0xff]
    %v87 = vld [vmem:[#allocation3 + $0xe8] sm:$0xff]
    %v88 = vld [vmem:[#allocation3 + $0xf0] sm:$0xff]
    %v89 = vld [vmem:[#allocation3 + $0xf8] sm:$0xff]
    %v90 = vld [vmem:[#allocation3 + $0x100] sm:$0xff]
    %v91 = vld [vmem:[#allocation3 + $0x108] sm:$0xff]
    %v92 = vld [vmem:[#allocation3 + $0x110] sm:$0xff]
    %v93 = vld [vmem:[#allocation3 + $0x118] sm:$0xff]
    %v94 = vld [vmem:[#allocation3 + $0x120] sm:$0xff]
    %v95 = vld [vmem:[#allocation3 + $0x128] sm:$0xff]
    %v96 = vld [vmem:[#allocation3 + $0x130] sm:$0xff]
    %v97 = vld [vmem:[#allocation3 + $0x138] sm:$0xff]
    %v98 = vld [vmem:[#allocation3 + $0x140] sm:$0xff]
    %v99 = vld [vmem:[#allocation3 + $0x148] sm:$0xff]
    %v100 = vld [vmem:[#allocation3 + $0x150] sm:$0xff]
    %v101 = vld [vmem:[#allocation3 + $0x158] sm:$0xff]
    %v102 = vld [vmem:[#allocation3 + $0x160] sm:$0xff]
    %v103 = vld [vmem:[#allocation3 + $0x168] sm:$0xff]
    %v104 = vld [vmem:[#allocation3 + $0x170] sm:$0xff]
    %v105 = vld [vmem:[#allocation3 + $0x178] sm:$0xff]
    %v106 = vld [vmem:[#allocation3 + $0x180] sm:$0xff]
    %v107 = vld [vmem:[#allocation3 + $0x188] sm:$0xff]
    %v108 = vld [vmem:[#allocation3 + $0x190] sm:$0xff]
    %v109 = vld [vmem:[#allocation3 + $0x198] sm:$0xff]
    %v110 = vld [vmem:[#allocation3 + $0x1a0] sm:$0xff]
    %v111 = vld [vmem:[#allocation3 + $0x1a8] sm:$0xff]
    %v112 = vld [vmem:[#allocation3 + $0x1b0] sm:$0xff]
    %v113 = vld [vmem:[#allocation3 + $0x1b8] sm:$0xff]
    %v114 = vld [vmem:[#allocation3 + $0x1c0] sm:$0xff]
    %v115 = vld [vmem:[#allocation3 + $0x1c8] sm:$0xff]
    %v116 = vld [vmem:[#allocation3 + $0x1d0] sm:$0xff]
    %v117 = vld [vmem:[#allocation3 + $0x1d8] sm:$0xff]
    %v118 = vld [vmem:[#allocation3 + $0x1e0] sm:$0xff]
    %v119 = vld [vmem:[#allocation3 + $0x1e8] sm:$0xff]
    %v120 = vld [vmem:[#allocation3 + $0x1f0] sm:$0xff]
    %v121 = vld [vmem:[#allocation3 + $0x1f8] sm:$0xff]
    %v122 = vld [vmem:[%s2] sm:$0xf]
    %v124 = vlaneseq
    %v125 = vshrl.u32 %v124, 7
    %v126 = vsub.s32 0, %v125
    %v127 = vrot.slane %v122, %v126
    %v128 = vlaneseq
    %v129 = vshrl.u32 %v128, 7
    %v130 = vsub.s32 1, %v129
    %v131 = vrot.slane %v122, %v130
    %v132 = vlaneseq
    %v133 = vshrl.u32 %v132, 7
    %v134 = vsub.s32 2, %v133
    %v135 = vrot.slane %v122, %v134
    %v136 = vlaneseq
    %v137 = vshrl.u32 %v136, 7
    %v138 = vsub.s32 3, %v137
    %v139 = vrot.slane %v122, %v138
    %v146 = vunpack.c.l.b16 %v56
    %v147 = vunpack.c.h.b16 %v56
    %v148 = vunpack.c.l.b16 %v57
    %v149 = vunpack.c.h.b16 %v57
    %v150 = vpack.c.b16 %v148, %v146
    %v151 = vpack.c.b16 %v149, %v147
    %v218 = vunpack.c.l.b16 %v58
    %v219 = vunpack.c.h.b16 %v58
    %v220 = vunpack.c.l.b16 %v59
    %v221 = vunpack.c.h.b16 %v59
    %v222 = vunpack.c.l.b16 %v60
    %v223 = vunpack.c.h.b16 %v60
    %v224 = vunpack.c.l.b16 %v61
    %v225 = vunpack.c.h.b16 %v61
    %v226 = vunpack.c.l.b16 %v62
    %v227 = vunpack.c.h.b16 %v62
    %v228 = vunpack.c.l.b16 %v63
    %v229 = vunpack.c.h.b16 %v63
    %v230 = vunpack.c.l.b16 %v64
    %v231 = vunpack.c.h.b16 %v64
    %v232 = vunpack.c.l.b16 %v65
    %v233 = vunpack.c.h.b16 %v65
    %v234 = vunpack.c.l.b16 %v66
    %v235 = vunpack.c.h.b16 %v66
    %v236 = vunpack.c.l.b16 %v67
    %v237 = vunpack.c.h.b16 %v67
    %v238 = vunpack.c.l.b16 %v68
    %v239 = vunpack.c.h.b16 %v68
    %v240 = vunpack.c.l.b16 %v69
    %v241 = vunpack.c.h.b16 %v69
    %v242 = vunpack.c.l.b16 %v70
    %v243 = vunpack.c.h.b16 %v70
    %v244 = vunpack.c.l.b16 %v71
    %v245 = vunpack.c.h.b16 %v71
    %v246 = vunpack.c.l.b16 %v72
    %v247 = vunpack.c.h.b16 %v72
    %v248 = vunpack.c.l.b16 %v73
    %v249 = vunpack.c.h.b16 %v73
    %v250 = vunpack.c.l.b16 %v74
    %v251 = vunpack.c.h.b16 %v74
    %v252 = vunpack.c.l.b16 %v75
    %v253 = vunpack.c.h.b16 %v75
    %v254 = vunpack.c.l.b16 %v76
    %v255 = vunpack.c.h.b16 %v76
    %v256 = vunpack.c.l.b16 %v77
    %v257 = vunpack.c.h.b16 %v77
    %v258 = vunpack.c.l.b16 %v78
    %v259 = vunpack.c.h.b16 %v78
    %v260 = vunpack.c.l.b16 %v79
    %v261 = vunpack.c.h.b16 %v79
    %v262 = vunpack.c.l.b16 %v80
    %v263 = vunpack.c.h.b16 %v80
    %v264 = vunpack.c.l.b16 %v81
    %v265 = vunpack.c.h.b16 %v81
    %v266 = vunpack.c.l.b16 %v82
    %v267 = vunpack.c.h.b16 %v82
    %v268 = vunpack.c.l.b16 %v83
    %v269 = vunpack.c.h.b16 %v83
    %v270 = vunpack.c.l.b16 %v84
    %v271 = vunpack.c.h.b16 %v84
    %v272 = vunpack.c.l.b16 %v85
    %v273 = vunpack.c.h.b16 %v85
    %v274 = vunpack.c.l.b16 %v86
    %v275 = vunpack.c.h.b16 %v86
    %v276 = vunpack.c.l.b16 %v87
    %v277 = vunpack.c.h.b16 %v87
    %v278 = vunpack.c.l.b16 %v88
    %v279 = vunpack.c.h.b16 %v88
    %v280 = vunpack.c.l.b16 %v89
    %v281 = vunpack.c.h.b16 %v89
    %v282 = vunpack.c.l.b16 %v90
    %v283 = vunpack.c.h.b16 %v90
    %v284 = vunpack.c.l.b16 %v91
    %v285 = vunpack.c.h.b16 %v91
    %v286 = vunpack.c.l.b16 %v92
    %v287 = vunpack.c.h.b16 %v92
    %v288 = vunpack.c.l.b16 %v93
    %v289 = vunpack.c.h.b16 %v93
    %v290 = vunpack.c.l.b16 %v94
    %v291 = vunpack.c.h.b16 %v94
    %v292 = vunpack.c.l.b16 %v95
    %v293 = vunpack.c.h.b16 %v95
    %v294 = vunpack.c.l.b16 %v96
    %v295 = vunpack.c.h.b16 %v96
    %v296 = vunpack.c.l.b16 %v97
    %v297 = vunpack.c.h.b16 %v97
    %v298 = vunpack.c.l.b16 %v98
    %v299 = vunpack.c.h.b16 %v98
    %v300 = vunpack.c.l.b16 %v99
    %v301 = vunpack.c.h.b16 %v99
    %v302 = vunpack.c.l.b16 %v100
    %v303 = vunpack.c.h.b16 %v100
    %v304 = vunpack.c.l.b16 %v101
    %v305 = vunpack.c.h.b16 %v101
    %v306 = vunpack.c.l.b16 %v102
    %v307 = vunpack.c.h.b16 %v102
    %v308 = vunpack.c.l.b16 %v103
    %v309 = vunpack.c.h.b16 %v103
    %v310 = vunpack.c.l.b16 %v104
    %v311 = vunpack.c.h.b16 %v104
    %v312 = vunpack.c.l.b16 %v105
    %v313 = vunpack.c.h.b16 %v105
    %v314 = vunpack.c.l.b16 %v106
    %v315 = vunpack.c.h.b16 %v106
    %v316 = vunpack.c.l.b16 %v107
    %v317 = vunpack.c.h.b16 %v107
    %v318 = vunpack.c.l.b16 %v108
    %v319 = vunpack.c.h.b16 %v108
    %v320 = vunpack.c.l.b16 %v109
    %v321 = vunpack.c.h.b16 %v109
    %v322 = vunpack.c.l.b16 %v110
    %v323 = vunpack.c.h.b16 %v110
    %v324 = vunpack.c.l.b16 %v111
    %v325 = vunpack.c.h.b16 %v111
    %v326 = vunpack.c.l.b16 %v112
    %v327 = vunpack.c.h.b16 %v112
    %v328 = vunpack.c.l.b16 %v113
    %v329 = vunpack.c.h.b16 %v113
    %v330 = vunpack.c.l.b16 %v114
    %v331 = vunpack.c.h.b16 %v114
    %v332 = vunpack.c.l.b16 %v115
    %v333 = vunpack.c.h.b16 %v115
    %v334 = vunpack.c.l.b16 %v116
    %v335 = vunpack.c.h.b16 %v116
    %v336 = vunpack.c.l.b16 %v117
    %v337 = vunpack.c.h.b16 %v117
    %v338 = vunpack.c.l.b16 %v118
    %v339 = vunpack.c.h.b16 %v118
    %v340 = vunpack.c.l.b16 %v119
    %v341 = vunpack.c.h.b16 %v119
    %v342 = vunpack.c.l.b16 %v120
    %v343 = vunpack.c.h.b16 %v120
    %v344 = vunpack.c.l.b16 %v121
    %v345 = vunpack.c.h.b16 %v121
    %v346 = vpack.c.b16 %v222, %v218
    %v347 = vpack.c.b16 %v223, %v219
    %v348 = vpack.c.b16 %v224, %v220
    %v349 = vpack.c.b16 %v225, %v221
    %v350 = vpack.c.b16 %v230, %v226
    %v351 = vpack.c.b16 %v231, %v227
    %v352 = vpack.c.b16 %v232, %v228
    %v353 = vpack.c.b16 %v233, %v229
    %v354 = vpack.c.b16 %v238, %v234
    %v355 = vpack.c.b16 %v239, %v235
    %v356 = vpack.c.b16 %v240, %v236
    %v357 = vpack.c.b16 %v241, %v237
    %v358 = vpack.c.b16 %v246, %v242
    %v359 = vpack.c.b16 %v247, %v243
    %v360 = vpack.c.b16 %v248, %v244
    %v361 = vpack.c.b16 %v249, %v245
    %v362 = vpack.c.b16 %v254, %v250
    %v363 = vpack.c.b16 %v255, %v251
    %v364 = vpack.c.b16 %v256, %v252
    %v365 = vpack.c.b16 %v257, %v253
    %v366 = vpack.c.b16 %v262, %v258
    %v367 = vpack.c.b16 %v263, %v259
    %v368 = vpack.c.b16 %v264, %v260
    %v369 = vpack.c.b16 %v265, %v261
    %v370 = vpack.c.b16 %v270, %v266
    %v371 = vpack.c.b16 %v271, %v267
    %v372 = vpack.c.b16 %v272, %v268
    %v373 = vpack.c.b16 %v273, %v269
    %v374 = vpack.c.b16 %v278, %v274
    %v375 = vpack.c.b16 %v279, %v275
    %v376 = vpack.c.b16 %v280, %v276
    %v377 = vpack.c.b16 %v281, %v277
    %v378 = vpack.c.b16 %v286, %v282
    %v379 = vpack.c.b16 %v287, %v283
    %v380 = vpack.c.b16 %v288, %v284
    %v381 = vpack.c.b16 %v289, %v285
    %v382 = vpack.c.b16 %v294, %v290
    %v383 = vpack.c.b16 %v295, %v291
    %v384 = vpack.c.b16 %v296, %v292
    %v385 = vpack.c.b16 %v297, %v293
    %v386 = vpack.c.b16 %v302, %v298
    %v387 = vpack.c.b16 %v303, %v299
    %v388 = vpack.c.b16 %v304, %v300
    %v389 = vpack.c.b16 %v305, %v301
    %v390 = vpack.c.b16 %v310, %v306
    %v391 = vpack.c.b16 %v311, %v307
    %v392 = vpack.c.b16 %v312, %v308
    %v393 = vpack.c.b16 %v313, %v309
    %v394 = vpack.c.b16 %v318, %v314
    %v395 = vpack.c.b16 %v319, %v315
    %v396 = vpack.c.b16 %v320, %v316
    %v397 = vpack.c.b16 %v321, %v317
    %v398 = vpack.c.b16 %v326, %v322
    %v399 = vpack.c.b16 %v327, %v323
    %v400 = vpack.c.b16 %v328, %v324
    %v401 = vpack.c.b16 %v329, %v325
    %v402 = vpack.c.b16 %v334, %v330
    %v403 = vpack.c.b16 %v335, %v331
    %v404 = vpack.c.b16 %v336, %v332
    %v405 = vpack.c.b16 %v337, %v333
    %v406 = vpack.c.b16 %v342, %v338
    %v407 = vpack.c.b16 %v343, %v339
    %v408 = vpack.c.b16 %v344, %v340
    %v409 = vpack.c.b16 %v345, %v341
    %474 = vmatprep.subr.bf16.mxu0 %v347
    %475 = vmatpush1.bf16.msra.mxu0 %v346
    %476 = vmatprep.subr.bf16.mxu0 %v351
    %477 = vmatpush1.bf16.msra.mxu0 %v350
    %478 = vmatprep.subr.bf16.mxu0 %v355
    %479 = vmatpush1.bf16.msra.mxu0 %v354
    %480 = vmatprep.subr.bf16.mxu0 %v359
    %481 = vmatpush1.bf16.msra.mxu0 %v358
    %482 = vmatprep.subr.bf16.mxu0 %v363
    %483 = vmatpush1.bf16.msra.mxu0 %v362
    %484 = vmatprep.subr.bf16.mxu0 %v367
    %485 = vmatpush1.bf16.msra.mxu0 %v366
    %486 = vmatprep.subr.bf16.mxu0 %v371
    %487 = vmatpush1.bf16.msra.mxu0 %v370
    %488 = vmatprep.subr.bf16.mxu0 %v375
    %489 = vmatpush1.bf16.msra.mxu0 %v374
    %490 = vmatprep.subr.bf16.mxu0 %v379
    %491 = vmatpush1.bf16.msra.mxu0 %v378
    %492 = vmatprep.subr.bf16.mxu0 %v383
    %493 = vmatpush1.bf16.msra.mxu0 %v382
    %494 = vmatprep.subr.bf16.mxu0 %v387
    %495 = vmatpush1.bf16.msra.mxu0 %v386
    %496 = vmatprep.subr.bf16.mxu0 %v391
    %497 = vmatpush1.bf16.msra.mxu0 %v390
    %498 = vmatprep.subr.bf16.mxu0 %v395
    %499 = vmatpush1.bf16.msra.mxu0 %v394
    %500 = vmatprep.subr.bf16.mxu0 %v399
    %501 = vmatpush1.bf16.msra.mxu0 %v398
    %502 = vmatprep.subr.bf16.mxu0 %v403
    %503 = vmatpush1.bf16.msra.mxu0 %v402
    %504 = vmatprep.subr.bf16.mxu0 %v407
    %505 = vmatpush1.bf16.msra.mxu0 %v406
    %506 = vmatprep.mubr.bf16.mxu0 %v151
    %507 = vmatmul.mubr.bf16.gmra.mrb[0].mxu0 %v150
    %v508 = vpop.f32.mrb[0].mxu0
    %v509 = vadd.f32 %v127, %v508
    %v510 = vpop.f32.mrb[0].mxu0
    %v511 = vadd.f32 %v131, %v510
    %v512 = vpop.f32.mrb[0].mxu0
    %v513 = vadd.f32 %v127, %v512
    %v514 = vpop.f32.mrb[0].mxu0
    %v515 = vadd.f32 %v131, %v514
    %516 = vdwg.mxu0
    %517 = vmatprep.subr.bf16.mxu0 %v349
    %518 = vmatpush1.bf16.msra.mxu0 %v348
    %519 = vmatprep.subr.bf16.mxu0 %v353
    %520 = vmatpush1.bf16.msra.mxu0 %v352
    %521 = vmatprep.subr.bf16.mxu0 %v357
    %522 = vmatpush1.bf16.msra.mxu0 %v356
    %523 = vmatprep.subr.bf16.mxu0 %v361
    %524 = vmatpush1.bf16.msra.mxu0 %v360
    %525 = vmatprep.subr.bf16.mxu0 %v365
    %526 = vmatpush1.bf16.msra.mxu0 %v364
    %527 = vmatprep.subr.bf16.mxu0 %v369
    %528 = vmatpush1.bf16.msra.mxu0 %v368
    %529 = vmatprep.subr.bf16.mxu0 %v373
    %530 = vmatpush1.bf16.msra.mxu0 %v372
    %531 = vmatprep.subr.bf16.mxu0 %v377
    %532 = vmatpush1.bf16.msra.mxu0 %v376
    %533 = vmatprep.subr.bf16.mxu0 %v381
    %534 = vmatpush1.bf16.msra.mxu0 %v380
    %535 = vmatprep.subr.bf16.mxu0 %v385
    %536 = vmatpush1.bf16.msra.mxu0 %v384
    %537 = vmatprep.subr.bf16.mxu0 %v389
    %538 = vmatpush1.bf16.msra.mxu0 %v388
    %539 = vmatprep.subr.bf16.mxu0 %v393
    %540 = vmatpush1.bf16.msra.mxu0 %v392
    %541 = vmatprep.subr.bf16.mxu0 %v397
    %542 = vmatpush1.bf16.msra.mxu0 %v396
    %543 = vmatprep.subr.bf16.mxu0 %v401
    %544 = vmatpush1.bf16.msra.mxu0 %v400
    %545 = vmatprep.subr.bf16.mxu0 %v405
    %546 = vmatpush1.bf16.msra.mxu0 %v404
    %547 = vmatprep.subr.bf16.mxu0 %v409
    %548 = vmatpush1.bf16.msra.mxu0 %v408
    %549 = vmatprep.mubr.bf16.mxu0 %v151
    %550 = vmatmul.mubr.bf16.gmra.mrb[0].mxu0 %v150
    %v551 = vpop.f32.mrb[0].mxu0
    %v552 = vadd.f32 %v135, %v551
    %v553 = vpop.f32.mrb[0].mxu0
    %v554 = vadd.f32 %v139, %v553
    %v555 = vpop.f32.mrb[0].mxu0
    %v556 = vadd.f32 %v135, %v555
    %v557 = vpop.f32.mrb[0].mxu0
    %v558 = vadd.f32 %v139, %v557
    %559 = vdwg.mxu0
    %v560 = vxor.u32 %v509, 2147483648
    %v561 = vxor.u32 %v511, 2147483648
    %v562 = vxor.u32 %v513, 2147483648
    %v563 = vxor.u32 %v515, 2147483648
    %v564 = vmul.f32 %v560, 1.442695
    %v565 = vpow.pop %v564
    %v566 = vmul.f32 %v561, 1.442695
    %v567 = vpow.pop %v566
    %v568 = vmul.f32 %v562, 1.442695
    %v569 = vpow.pop %v568
    %v570 = vmul.f32 %v563, 1.442695
    %v571 = vpow.pop %v570
    %v572 = vadd.f32 %v565, 1.0
    %v573 = vadd.f32 %v567, 1.0
    %v574 = vadd.f32 %v569, 1.0
    %v575 = vadd.f32 %v571, 1.0
    %v576 = vrcp.pop %v572
    %v577 = vmul.f32 1.0, %v576
    %v578 = vrcp.pop %v573
    %v579 = vmul.f32 1.0, %v578
    %v580 = vrcp.pop %v574
    %v581 = vmul.f32 1.0, %v580
    %v582 = vrcp.pop %v575
    %v583 = vmul.f32 1.0, %v582
    %v584 = vmul.f32 %v509, %v577
    %v585 = vmul.f32 %v511, %v579
    %v586 = vmul.f32 %v513, %v581
    %v587 = vmul.f32 %v515, %v583
    %v588 = vmul.f32 %v584, %v552
    %v589 = vmul.f32 %v585, %v554
    %v590 = vmul.f32 %v586, %v556
    %v591 = vmul.f32 %v587, %v558
    %v592 = vld [vmem:[#allocation2] sm:$0xff]
    %v593 = vld [vmem:[#allocation2 + $0x8] sm:$0xff]
    %v594 = vld [vmem:[#allocation2 + $0x10] sm:$0xff]
    %v595 = vld [vmem:[#allocation2 + $0x18] sm:$0xff]
    %v596 = vpack.c.bf16 %v590, %v588
    %v597 = vpack.c.bf16 %v591, %v589
    %v598 = vld [vmem:[#allocation5] sm:$0xff]
    %v599 = vld [vmem:[#allocation5 + $0x8] sm:$0xff]
    %v600 = vld [vmem:[#allocation5 + $0x10] sm:$0xff]
    %v601 = vld [vmem:[#allocation5 + $0x18] sm:$0xff]
    %v602 = vld [vmem:[#allocation5 + $0x20] sm:$0xff]
    %v603 = vld [vmem:[#allocation5 + $0x28] sm:$0xff]
    %v604 = vld [vmem:[#allocation5 + $0x30] sm:$0xff]
    %v605 = vld [vmem:[#allocation5 + $0x38] sm:$0xff]
    %v606 = vld [vmem:[#allocation5 + $0x40] sm:$0xff]
    %v607 = vld [vmem:[#allocation5 + $0x48] sm:$0xff]
    %v608 = vld [vmem:[#allocation5 + $0x50] sm:$0xff]
    %v609 = vld [vmem:[#allocation5 + $0x58] sm:$0xff]
    %v610 = vld [vmem:[#allocation5 + $0x60] sm:$0xff]
    %v611 = vld [vmem:[#allocation5 + $0x68] sm:$0xff]
    %v612 = vld [vmem:[#allocation5 + $0x70] sm:$0xff]
    %v613 = vld [vmem:[#allocation5 + $0x78] sm:$0xff]
    %v614 = vld [vmem:[#allocation5 + $0x80] sm:$0xff]
    %v615 = vld [vmem:[#allocation5 + $0x88] sm:$0xff]
    %v616 = vld [vmem:[#allocation5 + $0x90] sm:$0xff]
    %v617 = vld [vmem:[#allocation5 + $0x98] sm:$0xff]
    %v618 = vld [vmem:[#allocation5 + $0xa0] sm:$0xff]
    %v619 = vld [vmem:[#allocation5 + $0xa8] sm:$0xff]
    %v620 = vld [vmem:[#allocation5 + $0xb0] sm:$0xff]
    %v621 = vld [vmem:[#allocation5 + $0xb8] sm:$0xff]
    %v622 = vld [vmem:[#allocation5 + $0xc0] sm:$0xff]
    %v623 = vld [vmem:[#allocation5 + $0xc8] sm:$0xff]
    %v624 = vld [vmem:[#allocation5 + $0xd0] sm:$0xff]
    %v625 = vld [vmem:[#allocation5 + $0xd8] sm:$0xff]
    %v626 = vld [vmem:[#allocation5 + $0xe0] sm:$0xff]
    %v627 = vld [vmem:[#allocation5 + $0xe8] sm:$0xff]
    %v628 = vld [vmem:[#allocation5 + $0xf0] sm:$0xff]
    %v629 = vld [vmem:[#allocation5 + $0xf8] sm:$0xff]
    %v662 = vunpack.c.l.b16 %v598
    %v663 = vunpack.c.h.b16 %v598
    %v664 = vunpack.c.l.b16 %v599
    %v665 = vunpack.c.h.b16 %v599
    %v666 = vunpack.c.l.b16 %v600
    %v667 = vunpack.c.h.b16 %v600
    %v668 = vunpack.c.l.b16 %v601
    %v669 = vunpack.c.h.b16 %v601
    %v670 = vunpack.c.l.b16 %v602
    %v671 = vunpack.c.h.b16 %v602
    %v672 = vunpack.c.l.b16 %v603
    %v673 = vunpack.c.h.b16 %v603
    %v674 = vunpack.c.l.b16 %v604
    %v675 = vunpack.c.h.b16 %v604
    %v676 = vunpack.c.l.b16 %v605
    %v677 = vunpack.c.h.b16 %v605
    %v678 = vunpack.c.l.b16 %v606
    %v679 = vunpack.c.h.b16 %v606
    %v680 = vunpack.c.l.b16 %v607
    %v681 = vunpack.c.h.b16 %v607
    %v682 = vunpack.c.l.b16 %v608
    %v683 = vunpack.c.h.b16 %v608
    %v684 = vunpack.c.l.b16 %v609
    %v685 = vunpack.c.h.b16 %v609
    %v686 = vunpack.c.l.b16 %v610
    %v687 = vunpack.c.h.b16 %v610
    %v688 = vunpack.c.l.b16 %v611
    %v689 = vunpack.c.h.b16 %v611
    %v690 = vunpack.c.l.b16 %v612
    %v691 = vunpack.c.h.b16 %v612
    %v692 = vunpack.c.l.b16 %v613
    %v693 = vunpack.c.h.b16 %v613
    %v694 = vunpack.c.l.b16 %v614
    %v695 = vunpack.c.h.b16 %v614
    %v696 = vunpack.c.l.b16 %v615
    %v697 = vunpack.c.h.b16 %v615
    %v698 = vunpack.c.l.b16 %v616
    %v699 = vunpack.c.h.b16 %v616
    %v700 = vunpack.c.l.b16 %v617
    %v701 = vunpack.c.h.b16 %v617
    %v702 = vunpack.c.l.b16 %v618
    %v703 = vunpack.c.h.b16 %v618
    %v704 = vunpack.c.l.b16 %v619
    %v705 = vunpack.c.h.b16 %v619
    %v706 = vunpack.c.l.b16 %v620
    %v707 = vunpack.c.h.b16 %v620
    %v708 = vunpack.c.l.b16 %v621
    %v709 = vunpack.c.h.b16 %v621
    %v710 = vunpack.c.l.b16 %v622
    %v711 = vunpack.c.h.b16 %v622
    %v712 = vunpack.c.l.b16 %v623
    %v713 = vunpack.c.h.b16 %v623
    %v714 = vunpack.c.l.b16 %v624
    %v715 = vunpack.c.h.b16 %v624
    %v716 = vunpack.c.l.b16 %v625
    %v717 = vunpack.c.h.b16 %v625
    %v718 = vunpack.c.l.b16 %v626
    %v719 = vunpack.c.h.b16 %v626
    %v720 = vunpack.c.l.b16 %v627
    %v721 = vunpack.c.h.b16 %v627
    %v722 = vunpack.c.l.b16 %v628
    %v723 = vunpack.c.h.b16 %v628
    %v724 = vunpack.c.l.b16 %v629
    %v725 = vunpack.c.h.b16 %v629
    %v726 = vpack.c.b16 %v664, %v662
    %v727 = vpack.c.b16 %v665, %v663
    %v728 = vpack.c.b16 %v668, %v666
    %v729 = vpack.c.b16 %v669, %v667
    %v730 = vpack.c.b16 %v672, %v670
    %v731 = vpack.c.b16 %v673, %v671
    %v732 = vpack.c.b16 %v676, %v674
    %v733 = vpack.c.b16 %v677, %v675
    %v734 = vpack.c.b16 %v680, %v678
    %v735 = vpack.c.b16 %v681, %v679
    %v736 = vpack.c.b16 %v684, %v682
    %v737 = vpack.c.b16 %v685, %v683
    %v738 = vpack.c.b16 %v688, %v686
    %v739 = vpack.c.b16 %v689, %v687
    %v740 = vpack.c.b16 %v692, %v690
    %v741 = vpack.c.b16 %v693, %v691
    %v742 = vpack.c.b16 %v696, %v694
    %v743 = vpack.c.b16 %v697, %v695
    %v744 = vpack.c.b16 %v700, %v698
    %v745 = vpack.c.b16 %v701, %v699
    %v746 = vpack.c.b16 %v704, %v702
    %v747 = vpack.c.b16 %v705, %v703
    %v748 = vpack.c.b16 %v708, %v706
    %v749 = vpack.c.b16 %v709, %v707
    %v750 = vpack.c.b16 %v712, %v710
    %v751 = vpack.c.b16 %v713, %v711
    %v752 = vpack.c.b16 %v716, %v714
    %v753 = vpack.c.b16 %v717, %v715
    %v754 = vpack.c.b16 %v720, %v718
    %v755 = vpack.c.b16 %v721, %v719
    %v756 = vpack.c.b16 %v724, %v722
    %v757 = vpack.c.b16 %v725, %v723
    %790 = vmatprep.subr.bf16.mxu0 %v727
    %791 = vmatpush1.bf16.msra.mxu0 %v726
    %792 = vmatprep.subr.bf16.mxu0 %v729
    %793 = vmatpush1.bf16.msra.mxu0 %v728
    %794 = vmatprep.subr.bf16.mxu0 %v731
    %795 = vmatpush1.bf16.msra.mxu0 %v730
    %796 = vmatprep.subr.bf16.mxu0 %v733
    %797 = vmatpush1.bf16.msra.mxu0 %v732
    %798 = vmatprep.subr.bf16.mxu0 %v735
    %799 = vmatpush1.bf16.msra.mxu0 %v734
    %800 = vmatprep.subr.bf16.mxu0 %v737
    %801 = vmatpush1.bf16.msra.mxu0 %v736
    %802 = vmatprep.subr.bf16.mxu0 %v739
    %803 = vmatpush1.bf16.msra.mxu0 %v738
    %804 = vmatprep.subr.bf16.mxu0 %v741
    %805 = vmatpush1.bf16.msra.mxu0 %v740
    %806 = vmatprep.subr.bf16.mxu0 %v743
    %807 = vmatpush1.bf16.msra.mxu0 %v742
    %808 = vmatprep.subr.bf16.mxu0 %v745
    %809 = vmatpush1.bf16.msra.mxu0 %v744
    %810 = vmatprep.subr.bf16.mxu0 %v747
    %811 = vmatpush1.bf16.msra.mxu0 %v746
    %812 = vmatprep.subr.bf16.mxu0 %v749
    %813 = vmatpush1.bf16.msra.mxu0 %v748
    %814 = vmatprep.subr.bf16.mxu0 %v751
    %815 = vmatpush1.bf16.msra.mxu0 %v750
    %816 = vmatprep.subr.bf16.mxu0 %v753
    %817 = vmatpush1.bf16.msra.mxu0 %v752
    %818 = vmatprep.subr.bf16.mxu0 %v755
    %819 = vmatpush1.bf16.msra.mxu0 %v754
    %820 = vmatprep.subr.bf16.mxu0 %v757
    %821 = vmatpush1.bf16.msra.mxu0 %v756
    %822 = vmatprep.mubr.bf16.mxu0 %v597
    %823 = vmatmul.mubr.bf16.gmra.mrb[0].mxu0 %v596
    %v824 = vpop.f32.mrb[0].mxu0
    %v825 = vadd.f32 0.0, %v824
    %v826 = vpop.f32.mrb[0].mxu0
    %v827 = vadd.f32 0.0, %v826
    %v828 = vpop.f32.mrb[0].mxu0
    %v829 = vadd.f32 0.0, %v828
    %v830 = vpop.f32.mrb[0].mxu0
    %v831 = vadd.f32 0.0, %v830
    %832 = vdwg.mxu0
    %v833 = vadd.f32 %v592, %v825
    %v834 = vadd.f32 %v593, %v827
    %v835 = vadd.f32 %v594, %v829
    %v836 = vadd.f32 %v595, %v831
    %837 = vst [vmem:[#allocation2] sm:$0xff] %v833
    %838 = vst [vmem:[#allocation2 + $0x8] sm:$0xff] %v834
    %839 = vst [vmem:[#allocation2 + $0x10] sm:$0xff] %v835
    %840 = vst [vmem:[#allocation2 + $0x18] sm:$0xff] %v836
    // Predicated region
    $region34: #{swiglu_mlp.1} parent=1 // pred_check
      %p841 = pneg %p48
    $region35: #{swiglu_mlp.1} parent=1 // pred_check_branch
      %843 = sbr.rel (%p841) target = $region37
    $region36: #{swiglu_mlp.1} parent=1 // pred_region
      %v844 = vld [vmem:[#allocation2] sm:$0xff]
      %v845 = vld [vmem:[#allocation2 + $0x8] sm:$0xff]
      %v846 = vld [vmem:[#allocation2 + $0x10] sm:$0xff]
      %v847 = vld [vmem:[#allocation2 + $0x18] sm:$0xff]
      %v848 = vld [vmem:[%s4] sm:$0x3]
      %v850 = vlaneseq
      %v851 = vshrl.u32 %v850, 7
      %v852 = vsub.s32 0, %v851
      %v853 = vrot.slane %v848, %v852
      %v854 = vlaneseq
      %v855 = vshrl.u32 %v854, 7
      %v856 = vsub.s32 1, %v855
      %v857 = vrot.slane %v848, %v856
      %v860 = vadd.f32 %v844, %v853
      %v861 = vadd.f32 %v845, %v857
      %v862 = vadd.f32 %v846, %v853
      %v863 = vadd.f32 %v847, %v857
      %864 = vst [vmem:[%s5] sm:$0xff] %v860
      %865 = vst [vmem:[%s5 + $0x8] sm:$0xff] %v861
      %866 = vst [vmem:[%s5 + $0x10] sm:$0xff] %v862
      %867 = vst [vmem:[%s5 + $0x18] sm:$0xff] %v863
    $region37: #{swiglu_mlp.1} parent=1 // pred_fallthru
      _
    // Predicated region
    $region38: #{swiglu_mlp.1} parent=1 // pred_check
      _
    $region39: #{swiglu_mlp.1} parent=1 // pred_check_branch
      %869 = sbr.rel (0) target = $region41
    $region40: #{swiglu_mlp.1} parent=1 // pred_region
      _
    $region41: #{swiglu_mlp.1} parent=1 // pred_fallthru
      _
    // Predicated region
    $region42: #{swiglu_mlp.1} parent=1 // pred_check
      _
    $region43: #{swiglu_mlp.1} parent=1 // pred_check_branch
      %871 = sbr.rel (0) target = $region45
    $region44: #{swiglu_mlp.1} parent=1 // pred_region
      _
    $region45: #{swiglu_mlp.1} parent=1 // pred_fallthru
      _
    %872 = vsyncpa [#allocation4], 1
    %873 = vsyncpa [#allocation6], 1

</llo_original>
